<compile_context>
chip_gen: v7x
topology: tpu7x:2x2x1
jax: 0.10.0
libtpu: 0.0.40
codegen_flags: <defaults>
</compile_context>

<pallas_src>
import jax
import jax.numpy as jnp
from jax.experimental import pallas as pl
from jax.experimental.pallas import tpu as pltpu
from jax.scipy.linalg import block_diag

# ---- module hyper-parameters (small, consistent with __init__) -------------
SI, VI = 32, 16          # in_dims  = (si, vi)
SO, VO = 32, 16          # out_dims = (so, vo)
HV = max(VI, VO)         # hv_dim default = max(vi, vo)
NORM_EPS = 1e-6

OUT_W = 128              # lane-dense packed output: [s_out | 3*gated v | 0 pad]
ROW_ALIGN = 32           # row-tile alignment (covers f32 and bf16 sublane tiling)
SINGLE_BLOCK_MAX = 512   # below this, one whole-array block (launch-bound anyway)

N_SMALL = 8              # tiny demo batch (single-block path)
N_MULTI = 300            # multi-tile + ragged-last-block validation batch

# TODO(synk): only the use_mlp=False forward path is implemented (no SiLU MLP
# for Ws and no Wv1), matching the module's default constructor arguments.


def gated_equiv_kernel(s_ref, v_ref, wmult_ref, wvd_ref, ws_ref, wd_ref,
                       bmult_ref, bs_ref, out_ref):
    f32 = jnp.float32
    s = s_ref[...].astype(f32)          # (tn, SI)
    v = v_ref[...].astype(f32)          # (tn, 3*VI)

    # MXU push 1: multiplier slab  [1 (SO) | vnew_c0 | vnew_c1 | vnew_c2 | 0 pad]
    # (ones come from the packed bias; vnew from block-diag Wv0 columns).
    mult = jnp.dot(v, wmult_ref[...], preferred_element_type=f32) + bmult_ref[...]

    # MXU push 2: per-component "vdot" projection of Wv0, all 3 components in
    # one push against a block-diagonal weight -> (tn, 3*HV).
    vd = jnp.dot(v, wvd_ref[...], preferred_element_type=f32)

    # Exact f32 3-way square-sum + eps clamp (VPU has slack; keeps numerics
    # identical to the reference).
    vd0 = vd[:, 0 * HV:1 * HV]
    vd1 = vd[:, 1 * HV:2 * HV]
    vd2 = vd[:, 2 * HV:3 * HV]
    vdot = jnp.maximum(vd0 * vd0 + vd1 * vd1 + vd2 * vd2, NORM_EPS)   # (tn, HV)

    # MXU pushes 3+4: Ws(cat([s, vdot])) + b without building s_cat — the s
    # rows and vdot rows of Ws are separate pre-packed weights; columns are
    # laid out as [s_out (SO) | gate | gate | gate | 0 pad].
    s_all = (jnp.dot(s, ws_ref[...], preferred_element_type=f32)
             + jnp.dot(vdot, wd_ref[...], preferred_element_type=f32)
             + bs_ref[...])                                           # (tn, OUT_W)

    # Gate the vector channels and store one full-width, lane-dense slab:
    #   [s_out | gate*vnew_c0 | gate*vnew_c1 | gate*vnew_c2 | 0 pad]
    out_ref[...] = (s_all * mult).astype(out_ref.dtype)


def _round_up(x, m):
    return ((x + m - 1) // m) * m


def _pick_row_tile(n: int, tile_n: int) -> int:
    """Whole array when tiny; otherwise >=2 grid steps (v7x megacore), capped
    at tile_n rows and aligned to ROW_ALIGN so partial tiles stay legal."""
    tile_cap = max(ROW_ALIGN, (tile_n // ROW_ALIGN) * ROW_ALIGN)
    if n <= min(SINGLE_BLOCK_MAX, tile_cap):
        return n                       # block == full array: no alignment needed
    half = _round_up(pl.cdiv(n, 2), ROW_ALIGN)
    return min(tile_cap, half)


def gated_equiv_block(s, v, wv0, ws, bs, *, tile_n=2048, activation_dtype=None):
    """s: (N, SI), v: (N, 3, VI) -> (s_out (N, SO), v_out (N, 3, VO)).

    activation_dtype: optionally cast s/v (and the output) to e.g. bfloat16 to
    halve HBM traffic on v6e/v7x; all in-kernel math stays f32.
    """
    n = s.shape[0]
    if activation_dtype is not None:
        s = s.astype(activation_dtype)
        v = v.astype(activation_dtype)
    act_dtype = s.dtype
    v_flat = v.reshape(n, 3 * VI)                     # free, contiguous reshape

    # --- pre-packed weights (tiny; fold into constants under jit) -----------
    f32 = jnp.float32
    wv0 = wv0.astype(f32)
    ws = ws.astype(f32)
    bs = bs.astype(f32)
    wd_, wn_ = wv0[:, :HV], wv0[:, HV:]               # (VI, HV), (VI, VO)
    pad_w = OUT_W - SO - 3 * VO                       # zero padding columns (48)

    # multiplier slab weights/bias: ones in the s_out columns come from b_mult
    w_mult = jnp.concatenate(
        [jnp.zeros((3 * VI, SO), f32),
         block_diag(wn_, wn_, wn_),
         jnp.zeros((3 * VI, pad_w), f32)], axis=1)                     # (48, 128)
    b_mult = jnp.concatenate(
        [jnp.ones((1, SO), f32), jnp.zeros((1, OUT_W - SO), f32)], axis=1)

    # block-diagonal Wv0 "vdot" part: one MXU push for all 3 spatial components
    w_vd = block_diag(wd_, wd_, wd_)                                   # (48, 48)

    # Ws reordered/duplicated to [s_out | gate x3 | 0 pad], split by input rows
    def ext_cols(m):
        return jnp.concatenate(
            [m[:, VO:], m[:, :VO], m[:, :VO], m[:, :VO],
             jnp.zeros((m.shape[0], pad_w), f32)], axis=1)
    w_s = ext_cols(ws[:SI])                                            # (SI, 128)
    w_d = ext_cols(ws[SI:])                                            # (HV, 128)
    b_s = ext_cols(bs)                                                 # (1, 128)

    # --- row tiling: no padding, ragged last block handled by Mosaic --------
    tn = _pick_row_tile(n, tile_n)
    grid = (pl.cdiv(n, tn),)

    out = pl.pallas_call(
        gated_equiv_kernel,
        out_shape=jax.ShapeDtypeStruct((n, OUT_W), act_dtype),
        grid_spec=pl.GridSpec(
            grid=grid,
            in_specs=[
                pl.BlockSpec((tn, SI), lambda i: (i, 0)),
                pl.BlockSpec((tn, 3 * VI), lambda i: (i, 0)),
                pl.BlockSpec((3 * VI, OUT_W), lambda i: (0, 0)),
                pl.BlockSpec((3 * VI, 3 * HV), lambda i: (0, 0)),
                pl.BlockSpec((SI, OUT_W), lambda i: (0, 0)),
                pl.BlockSpec((HV, OUT_W), lambda i: (0, 0)),
                pl.BlockSpec((1, OUT_W), lambda i: (0, 0)),
                pl.BlockSpec((1, OUT_W), lambda i: (0, 0)),
            ],
            out_specs=pl.BlockSpec((tn, OUT_W), lambda i: (i, 0)),
        ),
        compiler_params=pltpu.CompilerParams(
            dimension_semantics=("parallel",),
            # safe on all generations; covers v5e's 16 MiB scoped default
            vmem_limit_bytes=32 * 1024 * 1024),
    )(s, v_flat, w_mult, w_vd, w_s, w_d, b_mult, b_s)

    s_out = out[:, :SO]
    v_out = out[:, SO:SO + 3 * VO].reshape(n, 3, VO)  # free, contiguous reshape
    return s_out, v_out


def ref_forward(s, v, wv0, ws, bs):
    """Pure-JAX reference mirroring the PyTorch forward (use_mlp=False)."""
    vv = jnp.einsum("nci,io->nco", v, wv0)            # Wv0(v)
    vdot_part, v_new = vv[..., :HV], vv[..., HV:]
    vdot = jnp.maximum(jnp.sum(vdot_part ** 2, axis=1), NORM_EPS)
    s_cat = jnp.concatenate([s, vdot], axis=-1)
    s_all = s_cat @ ws + bs                           # Ws(.) + bias
    gate, s_out = s_all[:, :VO], s_all[:, VO:]
    v_out = gate[:, None, :] * v_new
    return s_out, v_out


if __name__ == "__main__":
    key = jax.random.PRNGKey(0)
    k_s, k_v, k_w0, k_ws, k_b = jax.random.split(key, 5)

    # deterministic synthetic parameters
    wv0 = jax.random.normal(k_w0, (VI, HV + VO), dtype=jnp.float32) * (1.0 / VI ** 0.5)
    ws = jax.random.normal(k_ws, (SI + HV, VO + SO), dtype=jnp.float32) * (1.0 / (SI + HV) ** 0.5)
    bs = jax.random.normal(k_b, (1, VO + SO), dtype=jnp.float32) * 0.1

    # 1) tiny single-block path (N=8), f32
    s8 = jax.random.normal(k_s, (N_SMALL, SI), dtype=jnp.float32)
    v8 = jax.random.normal(k_v, (N_SMALL, 3, VI), dtype=jnp.float32)
    s_out, v_out = gated_equiv_block(s8, v8, wv0, ws, bs)
    jax.block_until_ready((s_out, v_out))
    s_r, v_r = ref_forward(s8, v8, wv0, ws, bs)
    assert s_out.shape == (N_SMALL, SO) and v_out.shape == (N_SMALL, 3, VO)
    assert jnp.allclose(s_out, s_r, atol=1e-4, rtol=1e-4)
    assert jnp.allclose(v_out, v_r, atol=1e-4, rtol=1e-4)

    # 2) multi-tile path with a ragged last block (tile=64 -> grid=5, last 44 rows), f32
    k_s2, k_v2 = jax.random.split(k_s)
    sm = jax.random.normal(k_s2, (N_MULTI, SI), dtype=jnp.float32)
    vm = jax.random.normal(k_v2, (N_MULTI, 3, VI), dtype=jnp.float32)
    s_out2, v_out2 = gated_equiv_block(sm, vm, wv0, ws, bs, tile_n=64)
    jax.block_until_ready((s_out2, v_out2))
    s_r2, v_r2 = ref_forward(sm, vm, wv0, ws, bs)
    assert jnp.allclose(s_out2, s_r2, atol=1e-4, rtol=1e-4)
    assert jnp.allclose(v_out2, v_r2, atol=1e-4, rtol=1e-4)

    # 3) bf16 activations (halved HBM traffic on v6e/v7x); compare against the
    #    f32 reference evaluated on the bf16-rounded inputs (loose tolerance
    #    only for the bf16 output rounding).
    s_bf = sm.astype(jnp.bfloat16).astype(jnp.float32)
    v_bf = vm.astype(jnp.bfloat16).astype(jnp.float32)
    s_out3, v_out3 = gated_equiv_block(sm, vm, wv0, ws, bs, tile_n=64,
                                       activation_dtype=jnp.bfloat16)
    jax.block_until_ready((s_out3, v_out3))
    s_r3, v_r3 = ref_forward(s_bf, v_bf, wv0, ws, bs)
    assert s_out3.dtype == jnp.bfloat16 and v_out3.dtype == jnp.bfloat16
    assert jnp.allclose(s_out3.astype(jnp.float32), s_r3, atol=5e-2, rtol=5e-2)
    assert jnp.allclose(v_out3.astype(jnp.float32), v_r3, atol=5e-2, rtol=5e-2)

    print("KERNEL_OK")
</pallas_src>

<mosaic_0001>
module attributes {stable_mosaic.version = 11 : i64} {
  func.func @gated_equiv_kernel(%arg0: i32, %arg1: memref<8x32xf32, #tpu.memory_space<vmem>>, %arg2: memref<8x48xf32, #tpu.memory_space<vmem>>, %arg3: memref<48x128xf32, #tpu.memory_space<vmem>>, %arg4: memref<48x48xf32, #tpu.memory_space<vmem>>, %arg5: memref<32x128xf32, #tpu.memory_space<vmem>>, %arg6: memref<16x128xf32, #tpu.memory_space<vmem>>, %arg7: memref<1x128xf32, #tpu.memory_space<vmem>>, %arg8: memref<1x128xf32, #tpu.memory_space<vmem>>, %arg9: memref<8x128xf32, #tpu.memory_space<vmem>>) attributes {dimension_semantics = [#tpu.dimension_semantics<parallel>], iteration_bounds = array<i64: 1>, scalar_prefetch = 0 : i64, scratch_operands = 0 : i64, tpu.core_type = #tpu.core_type<tc>, window_params = [{transform_indices = @transform_0, window_bounds = array<i64: 8, 32>}, {transform_indices = @transform_1, window_bounds = array<i64: 8, 48>}, {pipeline_mode = #tpu.pipeline_mode<synchronous>, transform_indices = @transform_2, window_bounds = array<i64: 48, 128>}, {pipeline_mode = #tpu.pipeline_mode<synchronous>, transform_indices = @transform_3, window_bounds = array<i64: 48, 48>}, {pipeline_mode = #tpu.pipeline_mode<synchronous>, transform_indices = @transform_4, window_bounds = array<i64: 32, 128>}, {pipeline_mode = #tpu.pipeline_mode<synchronous>, transform_indices = @transform_5, window_bounds = array<i64: 16, 128>}, {pipeline_mode = #tpu.pipeline_mode<synchronous>, transform_indices = @transform_6, window_bounds = array<i64: 1, 128>}, {pipeline_mode = #tpu.pipeline_mode<synchronous>, transform_indices = @transform_7, window_bounds = array<i64: 1, 128>}, {transform_indices = @transform_8, window_bounds = array<i64: 8, 128>}]} {
    %c0 = arith.constant 0 : index
    %c0_0 = arith.constant 0 : index
    %0 = vector.load %arg1[%c0, %c0_0] : memref<8x32xf32, #tpu.memory_space<vmem>>, vector<8x32xf32>
    %c0_1 = arith.constant 0 : index
    %c0_2 = arith.constant 0 : index
    %1 = vector.load %arg2[%c0_1, %c0_2] : memref<8x48xf32, #tpu.memory_space<vmem>>, vector<8x48xf32>
    %c0_3 = arith.constant 0 : index
    %c0_4 = arith.constant 0 : index
    %2 = vector.load %arg3[%c0_3, %c0_4] : memref<48x128xf32, #tpu.memory_space<vmem>>, vector<48x128xf32>
    %cst = arith.constant dense<0.000000e+00> : vector<8x128xf32>
    %3 = tpu.matmul %1, %2, %cst {dimension_numbers = #tpu.dot_dimension_numbers<[1], [0], [0], [1], [0, 0, 1, 1], [], []>} : vector<8x48xf32>, vector<48x128xf32>, vector<8x128xf32> -> vector<8x128xf32>
    %c0_5 = arith.constant 0 : index
    %c0_6 = arith.constant 0 : index
    %4 = vector.load %arg7[%c0_5, %c0_6] : memref<1x128xf32, #tpu.memory_space<vmem>>, vector<1x128xf32>
    %5 = vector.broadcast %4 : vector<1x128xf32> to vector<8x128xf32>
    %6 = arith.addf %3, %5 : vector<8x128xf32>
    %c0_7 = arith.constant 0 : index
    %c0_8 = arith.constant 0 : index
    %7 = vector.load %arg4[%c0_7, %c0_8] : memref<48x48xf32, #tpu.memory_space<vmem>>, vector<48x48xf32>
    %cst_9 = arith.constant dense<0.000000e+00> : vector<8x48xf32>
    %8 = tpu.matmul %1, %7, %cst_9 {dimension_numbers = #tpu.dot_dimension_numbers<[1], [0], [0], [1], [0, 0, 1, 1], [], []>} : vector<8x48xf32>, vector<48x48xf32>, vector<8x48xf32> -> vector<8x48xf32>
    %9 = vector.extract_strided_slice %8 {offsets = [0, 0], sizes = [8, 16], strides = [1, 1]} : vector<8x48xf32> to vector<8x16xf32>
    %10 = vector.extract_strided_slice %8 {offsets = [0, 16], sizes = [8, 16], strides = [1, 1]} : vector<8x48xf32> to vector<8x16xf32>
    %11 = vector.extract_strided_slice %8 {offsets = [0, 32], sizes = [8, 16], strides = [1, 1]} : vector<8x48xf32> to vector<8x16xf32>
    %12 = arith.mulf %9, %9 : vector<8x16xf32>
    %13 = arith.mulf %10, %10 : vector<8x16xf32>
    %14 = arith.addf %12, %13 : vector<8x16xf32>
    %15 = arith.mulf %11, %11 : vector<8x16xf32>
    %16 = arith.addf %14, %15 : vector<8x16xf32>
    %cst_10 = arith.constant 9.99999997E-7 : f32
    %17 = vector.broadcast %cst_10 : f32 to vector<8x16xf32>
    %18 = arith.maximumf %16, %17 : vector<8x16xf32>
    %c0_11 = arith.constant 0 : index
    %c0_12 = arith.constant 0 : index
    %19 = vector.load %arg5[%c0_11, %c0_12] : memref<32x128xf32, #tpu.memory_space<vmem>>, vector<32x128xf32>
    %cst_13 = arith.constant dense<0.000000e+00> : vector<8x128xf32>
    %20 = tpu.matmul %0, %19, %cst_13 {dimension_numbers = #tpu.dot_dimension_numbers<[1], [0], [0], [1], [0, 0, 1, 1], [], []>} : vector<8x32xf32>, vector<32x128xf32>, vector<8x128xf32> -> vector<8x128xf32>
    %c0_14 = arith.constant 0 : index
    %c0_15 = arith.constant 0 : index
    %21 = vector.load %arg6[%c0_14, %c0_15] : memref<16x128xf32, #tpu.memory_space<vmem>>, vector<16x128xf32>
    %cst_16 = arith.constant dense<0.000000e+00> : vector<8x128xf32>
    %22 = tpu.matmul %18, %21, %cst_16 {dimension_numbers = #tpu.dot_dimension_numbers<[1], [0], [0], [1], [0, 0, 1, 1], [], []>} : vector<8x16xf32>, vector<16x128xf32>, vector<8x128xf32> -> vector<8x128xf32>
    %23 = arith.addf %20, %22 : vector<8x128xf32>
    %c0_17 = arith.constant 0 : index
    %c0_18 = arith.constant 0 : index
    %24 = vector.load %arg8[%c0_17, %c0_18] : memref<1x128xf32, #tpu.memory_space<vmem>>, vector<1x128xf32>
    %25 = vector.broadcast %24 : vector<1x128xf32> to vector<8x128xf32>
    %26 = arith.addf %23, %25 : vector<8x128xf32>
    %27 = arith.mulf %26, %6 : vector<8x128xf32>
    %c0_19 = arith.constant 0 : index
    %c0_20 = arith.constant 0 : index
    %28 = vector.load %arg9[%c0_19, %c0_20] : memref<8x128xf32, #tpu.memory_space<vmem>>, vector<8x128xf32>
    tpu.vector_store %arg9[%c0_19, %c0_20], %27 {strides = array<i32>} : memref<8x128xf32, #tpu.memory_space<vmem>>, vector<8x128xf32>,
    return
  }
  func.func @transform_0(%arg0: i32) -> (i32, i32) {
    %c0_i32 = arith.constant 0 : i32
    %c0_i32_0 = arith.constant 0 : i32
    return %arg0, %c0_i32 : i32, i32
  }
  func.func @transform_1(%arg0: i32) -> (i32, i32) {
    %c0_i32 = arith.constant 0 : i32
    %c0_i32_0 = arith.constant 0 : i32
    return %arg0, %c0_i32 : i32, i32
  }
  func.func @transform_2(%arg0: i32) -> (i32, i32) {
    %c0_i32 = arith.constant 0 : i32
    %c0_i32_0 = arith.constant 0 : i32
    %c0_i32_1 = arith.constant 0 : i32
    return %c0_i32, %c0_i32_0 : i32, i32
  }
  func.func @transform_3(%arg0: i32) -> (i32, i32) {
    %c0_i32 = arith.constant 0 : i32
    %c0_i32_0 = arith.constant 0 : i32
    %c0_i32_1 = arith.constant 0 : i32
    return %c0_i32, %c0_i32_0 : i32, i32
  }
  func.func @transform_4(%arg0: i32) -> (i32, i32) {
    %c0_i32 = arith.constant 0 : i32
    %c0_i32_0 = arith.constant 0 : i32
    %c0_i32_1 = arith.constant 0 : i32
    return %c0_i32, %c0_i32_0 : i32, i32
  }
  func.func @transform_5(%arg0: i32) -> (i32, i32) {
    %c0_i32 = arith.constant 0 : i32
    %c0_i32_0 = arith.constant 0 : i32
    %c0_i32_1 = arith.constant 0 : i32
    return %c0_i32, %c0_i32_0 : i32, i32
  }
  func.func @transform_6(%arg0: i32) -> (i32, i32) {
    %c0_i32 = arith.constant 0 : i32
    %c0_i32_0 = arith.constant 0 : i32
    %c0_i32_1 = arith.constant 0 : i32
    return %c0_i32, %c0_i32_0 : i32, i32
  }
  func.func @transform_7(%arg0: i32) -> (i32, i32) {
    %c0_i32 = arith.constant 0 : i32
    %c0_i32_0 = arith.constant 0 : i32
    %c0_i32_1 = arith.constant 0 : i32
    return %c0_i32, %c0_i32_0 : i32, i32
  }
  func.func @transform_8(%arg0: i32) -> (i32, i32) {
    %c0_i32 = arith.constant 0 : i32
    %c0_i32_0 = arith.constant 0 : i32
    return %arg0, %c0_i32 : i32, i32
  }
}

</mosaic_0001>

<llo_original>
// kernel: tpu_custom_call.1
$region0: #{tpu_custom_call.1}
  #allocation0 [shape = 'u32[]', space=smem, size = 0x4, offset = 0x4, fixed_abs, tag = 'smem constant byte address 0x4 - core index']
  #allocation1 [shape = 'u32[144,128]{1,0:T(1,128)}', space=vmem, size = 0x12000, scoped, tag = 'internal scratch']
  %s0 = inlined_call_operand.hbm [shape: f32[8,32], index: 0, kind: input, shape index: {}]
  %s1 = inlined_call_operand.hbm [shape: f32[8,48], index: 1, kind: input, shape index: {}]
  %s2 = inlined_call_operand.hbm [shape: f32[48,128], index: 2, kind: input, shape index: {}]
  %s3 = inlined_call_operand.hbm [shape: f32[48,48], index: 3, kind: input, shape index: {}]
  %s4 = inlined_call_operand.hbm [shape: f32[32,128], index: 4, kind: input, shape index: {}]
  %s5 = inlined_call_operand.vmem [shape: f32[16,128], index: 5, kind: input, shape index: {}]
  %s6 = inlined_call_operand.vmem [shape: f32[1,128], index: 6, kind: input, shape index: {}]
  %s7 = inlined_call_operand.vmem [shape: f32[1,128], index: 7, kind: input, shape index: {}]
  %s8 = inlined_call_operand.hbm [shape: f32[8,128], index: 8, kind: output, shape index: {}]
  %s9 = sld [smem:[#allocation0]]
  $region62: #{tpu_custom_call.1} parent=0
    _
  %s11 = ssub.s32 1, %s9
  %s12 = scalar_select 0, %s11, %s9
  $region1: #{tpu_custom_call.1} parent=0
    #allocation2 [shape = 'u8[4096]{0}', space=vmem, size = 0x1000, scoped, tag = 'input window, operand 0, single buffered']
    #allocation3 [shape = 's32[1]{0}', space=sflag, size = 0x4, scoped, tag = 'scoped memory for tpu_custom_call.1']
    #allocation4 [shape = 's32[1]{0}', space=sflag, size = 0x4, scoped, tag = 'scoped memory for tpu_custom_call.1']
    #allocation5 [shape = 'u8[4096]{0}', space=vmem, size = 0x1000, scoped, tag = 'input window, operand 1, single buffered']
    #allocation6 [shape = 's32[1]{0}', space=sflag, size = 0x4, scoped, tag = 'scoped memory for tpu_custom_call.1']
    #allocation7 [shape = 'u8[24576]{0}', space=vmem, size = 0x6000, scoped, tag = 'input window, operand 2, single buffered']
    #allocation8 [shape = 'u8[24576]{0}', space=vmem, size = 0x6000, scoped, tag = 'input window, operand 3, single buffered']
    #allocation9 [shape = 's32[1]{0}', space=sflag, size = 0x4, scoped, tag = 'scoped memory for tpu_custom_call.1']
    #allocation10 [shape = 'u8[16384]{0}', space=vmem, size = 0x4000, scoped, tag = 'input window, operand 4, single buffered']
    #allocation11 [shape = 'u8[4096]{0}', space=vmem, size = 0x1000, scoped, tag = 'output window, operand 0, single buffered']
    %13 = vsyncpa [#allocation3], 0
    %14 = vsyncpa [#allocation6], 0
    %15 = vsyncpa [#allocation9], 0
    %16 = vsyncpa [#allocation4], 0
    // Predicated region
    $region2: #{tpu_custom_call.1} parent=1 // pred_check
      _
    $region3: #{tpu_custom_call.1} parent=1 // pred_check_branch
      %18 = sbr.rel (0) target = $region5
    $region4: #{tpu_custom_call.1} parent=1 // pred_region
      %s20 = ssub.s32 128, 128
      %21 = vsyncadd [#allocation3], %s20
      %s23 = sshll.u32 [#allocation2], 4
      %s24 = int_to_ptr.vmem [resolvable:$true] %s23
      %26 = dma.hbm_to_vmem [thread:$0]  %s0, 128, %s24, [#allocation3]
    $region5: #{tpu_custom_call.1} parent=1 // pred_fallthru
      _
    // Predicated region
    $region6: #{tpu_custom_call.1} parent=1 // pred_check
      _
    $region7: #{tpu_custom_call.1} parent=1 // pred_check_branch
      %28 = sbr.rel (0) target = $region9
    $region8: #{tpu_custom_call.1} parent=1 // pred_region
      %s30 = ssub.s32 128, 128
      %31 = vsyncadd [#allocation6], %s30
      %s33 = sshll.u32 [#allocation5], 4
      %s34 = int_to_ptr.vmem [resolvable:$true] %s33
      %36 = dma.hbm_to_vmem [thread:$0]  %s1, 128, %s34, [#allocation6]
    $region9: #{tpu_custom_call.1} parent=1 // pred_fallthru
      _
    // Predicated region
    $region10: #{tpu_custom_call.1} parent=1 // pred_check
      _
    $region11: #{tpu_custom_call.1} parent=1 // pred_check_branch
      %38 = sbr.rel (0) target = $region13
    $region12: #{tpu_custom_call.1} parent=1 // pred_region
      %s40 = ssub.s32 768, 768
      %41 = vsyncadd [#allocation6], %s40
      %s42 = sshll.u32 [#allocation7], 4
      %s43 = int_to_ptr.vmem [resolvable:$true] %s42
      %48 = dma.hbm_to_vmem [thread:$0]  %s2, 768, %s43, [#allocation6], 128, 128, 8
    $region13: #{tpu_custom_call.1} parent=1 // pred_fallthru
      _
    // Predicated region
    $region14: #{tpu_custom_call.1} parent=1 // pred_check
      _
    $region15: #{tpu_custom_call.1} parent=1 // pred_check_branch
      %50 = sbr.rel (0) target = $region17
    $region16: #{tpu_custom_call.1} parent=1 // pred_region
      %s52 = ssub.s32 768, 768
      %53 = vsyncadd [#allocation9], %s52
      %s54 = sshll.u32 [#allocation8], 4
      %s55 = int_to_ptr.vmem [resolvable:$true] %s54
      %60 = dma.hbm_to_vmem [thread:$0]  %s3, 768, %s55, [#allocation9], 128, 128, 8
    $region17: #{tpu_custom_call.1} parent=1 // pred_fallthru
      _
    // Predicated region
    $region18: #{tpu_custom_call.1} parent=1 // pred_check
      _
    $region19: #{tpu_custom_call.1} parent=1 // pred_check_branch
      %62 = sbr.rel (0) target = $region21
    $region20: #{tpu_custom_call.1} parent=1 // pred_region
      %s64 = ssub.s32 512, 512
      %65 = vsyncadd [#allocation9], %s64
      %s66 = sshll.u32 [#allocation10], 4
      %s67 = int_to_ptr.vmem [resolvable:$true] %s66
      %72 = dma.hbm_to_vmem [thread:$0]  %s4, 512, %s67, [#allocation9], 128, 128, 8
    $region21: #{tpu_custom_call.1} parent=1 // pred_fallthru
      _
    // Predicated region
    $region22: #{tpu_custom_call.1} parent=1 // pred_check
      _
    $region23: #{tpu_custom_call.1} parent=1 // pred_check_branch
      %74 = sbr.rel (0) target = $region25
    $region24: #{tpu_custom_call.1} parent=1 // pred_region
      _
    $region25: #{tpu_custom_call.1} parent=1 // pred_fallthru
      _
    // Predicated region
    $region26: #{tpu_custom_call.1} parent=1 // pred_check
      _
    $region27: #{tpu_custom_call.1} parent=1 // pred_check_branch
      %76 = sbr.rel (0) target = $region29
    $region28: #{tpu_custom_call.1} parent=1 // pred_region
      _
    $region29: #{tpu_custom_call.1} parent=1 // pred_fallthru
      _
    // Predicated region
    $region30: #{tpu_custom_call.1} parent=1 // pred_check
      _
    $region31: #{tpu_custom_call.1} parent=1 // pred_check_branch
      %78 = sbr.rel (0) target = $region33
    $region32: #{tpu_custom_call.1} parent=1 // pred_region
      _
    $region33: #{tpu_custom_call.1} parent=1 // pred_fallthru
      _
    // Predicated region
    $region34: #{tpu_custom_call.1} parent=1 // pred_check
      _
    $region35: #{tpu_custom_call.1} parent=1 // pred_check_branch
      %80 = sbr.rel (0) target = $region37
    $region36: #{tpu_custom_call.1} parent=1 // pred_region
      %81 = dma.done [#allocation3], 128
    $region37: #{tpu_custom_call.1} parent=1 // pred_fallthru
      _
    // Predicated region
    $region38: #{tpu_custom_call.1} parent=1 // pred_check
      _
    $region39: #{tpu_custom_call.1} parent=1 // pred_check_branch
      %83 = sbr.rel (0) target = $region41
    $region40: #{tpu_custom_call.1} parent=1 // pred_region
      %84 = dma.done [#allocation6], 128
    $region41: #{tpu_custom_call.1} parent=1 // pred_fallthru
      _
    // Predicated region
    $region42: #{tpu_custom_call.1} parent=1 // pred_check
      _
    $region43: #{tpu_custom_call.1} parent=1 // pred_check_branch
      %86 = sbr.rel (0) target = $region45
    $region44: #{tpu_custom_call.1} parent=1 // pred_region
      %87 = dma.done [#allocation6], 768
    $region45: #{tpu_custom_call.1} parent=1 // pred_fallthru
      _
    // Predicated region
    $region46: #{tpu_custom_call.1} parent=1 // pred_check
      _
    $region47: #{tpu_custom_call.1} parent=1 // pred_check_branch
      %89 = sbr.rel (0) target = $region49
    $region48: #{tpu_custom_call.1} parent=1 // pred_region
      %90 = dma.done [#allocation9], 768
    $region49: #{tpu_custom_call.1} parent=1 // pred_fallthru
      _
    // Predicated region
    $region50: #{tpu_custom_call.1} parent=1 // pred_check
      _
    $region51: #{tpu_custom_call.1} parent=1 // pred_check_branch
      %92 = sbr.rel (0) target = $region53
    $region52: #{tpu_custom_call.1} parent=1 // pred_region
      %93 = dma.done [#allocation9], 512
    $region53: #{tpu_custom_call.1} parent=1 // pred_fallthru
      _
    %v94 = vld [vmem:[#allocation2] sm:$0xff]
    %v95 = vld [vmem:[#allocation5] sm:$0xff]
    %v96 = vld [vmem:[#allocation7] sm:$0xff]
    %v97 = vld [vmem:[#allocation7 + $0x8] sm:$0xff]
    %v98 = vld [vmem:[#allocation7 + $0x10] sm:$0xff]
    %v99 = vld [vmem:[#allocation7 + $0x18] sm:$0xff]
    %v100 = vld [vmem:[#allocation7 + $0x20] sm:$0xff]
    %v101 = vld [vmem:[#allocation7 + $0x28] sm:$0xff]
    %v102 = vld [vmem:[%s6] sm:$0x1]
    %v104 = vlaneseq
    %v105 = vshrl.u32 %v104, 7
    %v106 = vsub.s32 0, %v105
    %v107 = vrot.slane %v102, %v106
    %vm109 = vcmask 392192
    %v111 = vsel %vm109, %v95, 0
    %113 = vmatprep.subr.mxu0 0.0
    %114 = vmatpush1.msra.mxu0 %v96
    %115 = vmatprep.subr.mxu0 0.0
    %116 = vmatpush1.msra.mxu0 %v97
    %117 = vmatprep.subr.mxu0 0.0
    %118 = vmatpush1.msra.mxu0 %v98
    %119 = vmatprep.subr.mxu0 0.0
    %120 = vmatpush1.msra.mxu0 %v99
    %121 = vmatprep.subr.mxu0 0.0
    %122 = vmatpush1.msra.mxu0 %v100
    %123 = vmatprep.subr.mxu0 0.0
    %124 = vmatpush1.msra.mxu0 %v101
    %125 = vmatprep.subr.mxu0 0.0
    %126 = vmatpush1.msra.mxu0 0.0
    %127 = vmatprep.subr.mxu0 0.0
    %128 = vmatpush1.msra.mxu0 0.0
    %129 = vmatprep.subr.mxu0 0.0
    %130 = vmatpush1.msra.mxu0 0.0
    %131 = vmatprep.subr.mxu0 0.0
    %132 = vmatpush1.msra.mxu0 0.0
    %133 = vmatprep.subr.mxu0 0.0
    %134 = vmatpush1.msra.mxu0 0.0
    %135 = vmatprep.subr.mxu0 0.0
    %136 = vmatpush1.msra.mxu0 0.0
    %137 = vmatprep.subr.mxu0 0.0
    %138 = vmatpush1.msra.mxu0 0.0
    %139 = vmatprep.subr.mxu0 0.0
    %140 = vmatpush1.msra.mxu0 0.0
    %141 = vmatprep.subr.mxu0 0.0
    %142 = vmatpush1.msra.mxu0 0.0
    %143 = vmatprep.subr.mxu0 0.0
    %144 = vmatpush1.msra.mxu0 0.0
    %145 = vmatprep.subr.mxu0 0.0
    %146 = vmatpush1.msra.mxu0 0.0
    %147 = vmatprep.subr.mxu0 0.0
    %148 = vmatpush1.msra.mxu0 0.0
    %149 = vmatprep.subr.mxu0 0.0
    %150 = vmatpush1.msra.mxu0 0.0
    %151 = vmatprep.subr.mxu0 0.0
    %152 = vmatpush1.msra.mxu0 0.0
    %153 = vmatprep.subr.mxu0 0.0
    %154 = vmatpush1.msra.mxu0 0.0
    %155 = vmatprep.subr.mxu0 0.0
    %156 = vmatpush1.msra.mxu0 0.0
    %157 = vmatprep.subr.mxu0 0.0
    %158 = vmatpush1.msra.mxu0 0.0
    %159 = vmatprep.subr.mxu0 0.0
    %160 = vmatpush1.msra.mxu0 0.0
    %161 = vmatprep.subr.mxu0 0.0
    %162 = vmatpush1.msra.mxu0 0.0
    %163 = vmatprep.subr.mxu0 0.0
    %164 = vmatpush1.msra.mxu0 0.0
    %165 = vmatprep.subr.mxu0 0.0
    %166 = vmatpush1.msra.mxu0 0.0
    %167 = vmatprep.subr.mxu0 0.0
    %168 = vmatpush1.msra.mxu0 0.0
    %169 = vmatprep.subr.mxu0 0.0
    %170 = vmatpush1.msra.mxu0 0.0
    %171 = vmatprep.subr.mxu0 0.0
    %172 = vmatpush1.msra.mxu0 0.0
    %173 = vmatprep.subr.mxu0 0.0
    %174 = vmatpush1.msra.mxu0 0.0
    %175 = vmatprep.subr.mxu0 0.0
    %176 = vmatpush1.msra.mxu0 0.0
    %177 = vmatprep.mubr.f32.mxu0 0.0
    %178 = vmatmul.mubr.f32.gmra.mrb[0].mxu0 %v111
    %v179 = vpop.f32.mrb[0].mxu0
    %v180 = vadd.f32 %v107, %v179
    %v181 = vpop.f32.mrb[0].mxu0
    %182 = vdwg.mxu0
    %v183 = vld [vmem:[#allocation8] sm:$0xff]
    %v184 = vld [vmem:[#allocation8 + $0x8] sm:$0xff]
    %v185 = vld [vmem:[#allocation8 + $0x10] sm:$0xff]
    %v186 = vld [vmem:[#allocation8 + $0x18] sm:$0xff]
    %v187 = vld [vmem:[#allocation8 + $0x20] sm:$0xff]
    %v188 = vld [vmem:[#allocation8 + $0x28] sm:$0xff]
    %189 = vmatprep.subr.mxu0 0.0
    %190 = vmatpush1.msra.mxu0 %v183
    %191 = vmatprep.subr.mxu0 0.0
    %192 = vmatpush1.msra.mxu0 %v184
    %193 = vmatprep.subr.mxu0 0.0
    %194 = vmatpush1.msra.mxu0 %v185
    %195 = vmatprep.subr.mxu0 0.0
    %196 = vmatpush1.msra.mxu0 %v186
    %197 = vmatprep.subr.mxu0 0.0
    %198 = vmatpush1.msra.mxu0 %v187
    %199 = vmatprep.subr.mxu0 0.0
    %200 = vmatpush1.msra.mxu0 %v188
    %201 = vmatprep.subr.mxu0 0.0
    %202 = vmatpush1.msra.mxu0 0.0
    %203 = vmatprep.subr.mxu0 0.0
    %204 = vmatpush1.msra.mxu0 0.0
    %205 = vmatprep.subr.mxu0 0.0
    %206 = vmatpush1.msra.mxu0 0.0
    %207 = vmatprep.subr.mxu0 0.0
    %208 = vmatpush1.msra.mxu0 0.0
    %209 = vmatprep.subr.mxu0 0.0
    %210 = vmatpush1.msra.mxu0 0.0
    %211 = vmatprep.subr.mxu0 0.0
    %212 = vmatpush1.msra.mxu0 0.0
    %213 = vmatprep.subr.mxu0 0.0
    %214 = vmatpush1.msra.mxu0 0.0
    %215 = vmatprep.subr.mxu0 0.0
    %216 = vmatpush1.msra.mxu0 0.0
    %217 = vmatprep.subr.mxu0 0.0
    %218 = vmatpush1.msra.mxu0 0.0
    %219 = vmatprep.subr.mxu0 0.0
    %220 = vmatpush1.msra.mxu0 0.0
    %221 = vmatprep.subr.mxu0 0.0
    %222 = vmatpush1.msra.mxu0 0.0
    %223 = vmatprep.subr.mxu0 0.0
    %224 = vmatpush1.msra.mxu0 0.0
    %225 = vmatprep.subr.mxu0 0.0
    %226 = vmatpush1.msra.mxu0 0.0
    %227 = vmatprep.subr.mxu0 0.0
    %228 = vmatpush1.msra.mxu0 0.0
    %229 = vmatprep.subr.mxu0 0.0
    %230 = vmatpush1.msra.mxu0 0.0
    %231 = vmatprep.subr.mxu0 0.0
    %232 = vmatpush1.msra.mxu0 0.0
    %233 = vmatprep.subr.mxu0 0.0
    %234 = vmatpush1.msra.mxu0 0.0
    %235 = vmatprep.subr.mxu0 0.0
    %236 = vmatpush1.msra.mxu0 0.0
    %237 = vmatprep.subr.mxu0 0.0
    %238 = vmatpush1.msra.mxu0 0.0
    %239 = vmatprep.subr.mxu0 0.0
    %240 = vmatpush1.msra.mxu0 0.0
    %241 = vmatprep.subr.mxu0 0.0
    %242 = vmatpush1.msra.mxu0 0.0
    %243 = vmatprep.subr.mxu0 0.0
    %244 = vmatpush1.msra.mxu0 0.0
    %245 = vmatprep.subr.mxu0 0.0
    %246 = vmatpush1.msra.mxu0 0.0
    %247 = vmatprep.subr.mxu0 0.0
    %248 = vmatpush1.msra.mxu0 0.0
    %249 = vmatprep.subr.mxu0 0.0
    %250 = vmatpush1.msra.mxu0 0.0
    %251 = vmatprep.subr.mxu0 0.0
    %252 = vmatpush1.msra.mxu0 0.0
    %253 = vmatprep.mubr.f32.mxu0 0.0
    %254 = vmatmul.mubr.f32.gmra.mrb[0].mxu0 %v111
    %v255 = vpop.f32.mrb[0].mxu0
    %v256 = vadd.f32 0.0, %v255
    %v257 = vpop.f32.mrb[0].mxu0
    %258 = vdwg.mxu0
    %v259 = vmul.f32 %v256, %v256
    %261 = vrot.lane.b32.xlu0 %v259, 112
    %v262 = vpop.permute.xlu0 %261
    %v264 = vadd.f32 %v259, %v262
    %265 = vrot.lane.b32.xlu0 %v259, 96
    %v266 = vpop.permute.xlu0 %265
    %v268 = vadd.f32 %v264, %v266
    %v269 = vmax.f32 %v268, 1e-06
    %v270 = vld [vmem:[#allocation10] sm:$0xff]
    %v271 = vld [vmem:[#allocation10 + $0x8] sm:$0xff]
    %v272 = vld [vmem:[#allocation10 + $0x10] sm:$0xff]
    %v273 = vld [vmem:[#allocation10 + $0x18] sm:$0xff]
    %v274 = vld [vmem:[%s5] sm:$0xff]
    %v275 = vld [vmem:[%s5 + $0x8] sm:$0xff]
    %vm276 = vcmask 130048
    %v278 = vsel %vm276, %v269, 0
    %280 = vmatprep.subr.mxu0 0.0
    %281 = vmatpush1.msra.mxu0 %v274
    %282 = vmatprep.subr.mxu0 0.0
    %283 = vmatpush1.msra.mxu0 %v275
    %284 = vmatprep.subr.mxu0 0.0
    %285 = vmatpush1.msra.mxu0 0.0
    %286 = vmatprep.subr.mxu0 0.0
    %287 = vmatpush1.msra.mxu0 0.0
    %288 = vmatprep.subr.mxu0 0.0
    %289 = vmatpush1.msra.mxu0 0.0
    %290 = vmatprep.subr.mxu0 0.0
    %291 = vmatpush1.msra.mxu0 0.0
    %292 = vmatprep.subr.mxu0 0.0
    %293 = vmatpush1.msra.mxu0 0.0
    %294 = vmatprep.subr.mxu0 0.0
    %295 = vmatpush1.msra.mxu0 0.0
    %296 = vmatprep.subr.mxu0 0.0
    %297 = vmatpush1.msra.mxu0 0.0
    %298 = vmatprep.subr.mxu0 0.0
    %299 = vmatpush1.msra.mxu0 0.0
    %300 = vmatprep.subr.mxu0 0.0
    %301 = vmatpush1.msra.mxu0 0.0
    %302 = vmatprep.subr.mxu0 0.0
    %303 = vmatpush1.msra.mxu0 0.0
    %304 = vmatprep.subr.mxu0 0.0
    %305 = vmatpush1.msra.mxu0 0.0
    %306 = vmatprep.subr.mxu0 0.0
    %307 = vmatpush1.msra.mxu0 0.0
    %308 = vmatprep.subr.mxu0 0.0
    %309 = vmatpush1.msra.mxu0 0.0
    %310 = vmatprep.subr.mxu0 0.0
    %311 = vmatpush1.msra.mxu0 0.0
    %312 = vmatprep.subr.mxu0 0.0
    %313 = vmatpush1.msra.mxu0 0.0
    %314 = vmatprep.subr.mxu0 0.0
    %315 = vmatpush1.msra.mxu0 0.0
    %316 = vmatprep.subr.mxu0 0.0
    %317 = vmatpush1.msra.mxu0 0.0
    %318 = vmatprep.subr.mxu0 0.0
    %319 = vmatpush1.msra.mxu0 0.0
    %320 = vmatprep.subr.mxu0 0.0
    %321 = vmatpush1.msra.mxu0 0.0
    %322 = vmatprep.subr.mxu0 0.0
    %323 = vmatpush1.msra.mxu0 0.0
    %324 = vmatprep.subr.mxu0 0.0
    %325 = vmatpush1.msra.mxu0 0.0
    %326 = vmatprep.subr.mxu0 0.0
    %327 = vmatpush1.msra.mxu0 0.0
    %328 = vmatprep.subr.mxu0 0.0
    %329 = vmatpush1.msra.mxu0 0.0
    %330 = vmatprep.subr.mxu0 0.0
    %331 = vmatpush1.msra.mxu0 0.0
    %332 = vmatprep.subr.mxu0 0.0
    %333 = vmatpush1.msra.mxu0 0.0
    %334 = vmatprep.subr.mxu0 0.0
    %335 = vmatpush1.msra.mxu0 0.0
    %336 = vmatprep.subr.mxu0 0.0
    %337 = vmatpush1.msra.mxu0 0.0
    %338 = vmatprep.subr.mxu0 0.0
    %339 = vmatpush1.msra.mxu0 0.0
    %340 = vmatprep.subr.mxu0 0.0
    %341 = vmatpush1.msra.mxu0 0.0
    %342 = vmatprep.subr.mxu0 0.0
    %343 = vmatpush1.msra.mxu0 0.0
    %344 = vmatprep.mubr.f32.mxu0 0.0
    %345 = vmatmul.mubr.f32.gmra.mrb[0].mxu0 %v278
    %v346 = vpop.f32.mrb[0].mxu0
    %v347 = vadd.f32 0.0, %v346
    %v348 = vpop.f32.mrb[0].mxu0
    %349 = vdwg.mxu0
    %vm350 = vcmask 261120
    %v352 = vsel %vm350, %v94, 0
    %354 = vmatprep.subr.mxu0 0.0
    %355 = vmatpush1.msra.mxu0 %v270
    %356 = vmatprep.subr.mxu0 0.0
    %357 = vmatpush1.msra.mxu0 %v271
    %358 = vmatprep.subr.mxu0 0.0
    %359 = vmatpush1.msra.mxu0 %v272
    %360 = vmatprep.subr.mxu0 0.0
    %361 = vmatpush1.msra.mxu0 %v273
    %362 = vmatprep.subr.mxu0 0.0
    %363 = vmatpush1.msra.mxu0 0.0
    %364 = vmatprep.subr.mxu0 0.0
    %365 = vmatpush1.msra.mxu0 0.0
    %366 = vmatprep.subr.mxu0 0.0
    %367 = vmatpush1.msra.mxu0 0.0
    %368 = vmatprep.subr.mxu0 0.0
    %369 = vmatpush1.msra.mxu0 0.0
    %370 = vmatprep.subr.mxu0 0.0
    %371 = vmatpush1.msra.mxu0 0.0
    %372 = vmatprep.subr.mxu0 0.0
    %373 = vmatpush1.msra.mxu0 0.0
    %374 = vmatprep.subr.mxu0 0.0
    %375 = vmatpush1.msra.mxu0 0.0
    %376 = vmatprep.subr.mxu0 0.0
    %377 = vmatpush1.msra.mxu0 0.0
    %378 = vmatprep.subr.mxu0 0.0
    %379 = vmatpush1.msra.mxu0 0.0
    %380 = vmatprep.subr.mxu0 0.0
    %381 = vmatpush1.msra.mxu0 0.0
    %382 = vmatprep.subr.mxu0 0.0
    %383 = vmatpush1.msra.mxu0 0.0
    %384 = vmatprep.subr.mxu0 0.0
    %385 = vmatpush1.msra.mxu0 0.0
    %386 = vmatprep.subr.mxu0 0.0
    %387 = vmatpush1.msra.mxu0 0.0
    %388 = vmatprep.subr.mxu0 0.0
    %389 = vmatpush1.msra.mxu0 0.0
    %390 = vmatprep.subr.mxu0 0.0
    %391 = vmatpush1.msra.mxu0 0.0
    %392 = vmatprep.subr.mxu0 0.0
    %393 = vmatpush1.msra.mxu0 0.0
    %394 = vmatprep.subr.mxu0 0.0
    %395 = vmatpush1.msra.mxu0 0.0
    %396 = vmatprep.subr.mxu0 0.0
    %397 = vmatpush1.msra.mxu0 0.0
    %398 = vmatprep.subr.mxu0 0.0
    %399 = vmatpush1.msra.mxu0 0.0
    %400 = vmatprep.subr.mxu0 0.0
    %401 = vmatpush1.msra.mxu0 0.0
    %402 = vmatprep.subr.mxu0 0.0
    %403 = vmatpush1.msra.mxu0 0.0
    %404 = vmatprep.subr.mxu0 0.0
    %405 = vmatpush1.msra.mxu0 0.0
    %406 = vmatprep.subr.mxu0 0.0
    %407 = vmatpush1.msra.mxu0 0.0
    %408 = vmatprep.subr.mxu0 0.0
    %409 = vmatpush1.msra.mxu0 0.0
    %410 = vmatprep.subr.mxu0 0.0
    %411 = vmatpush1.msra.mxu0 0.0
    %412 = vmatprep.subr.mxu0 0.0
    %413 = vmatpush1.msra.mxu0 0.0
    %414 = vmatprep.subr.mxu0 0.0
    %415 = vmatpush1.msra.mxu0 0.0
    %416 = vmatprep.subr.mxu0 0.0
    %417 = vmatpush1.msra.mxu0 0.0
    %418 = vmatprep.mubr.f32.mxu0 0.0
    %419 = vmatmul.mubr.f32.gmra.mrb[0].mxu0 %v352
    %v420 = vpop.f32.mrb[0].mxu0
    %v421 = vadd.f32 %v347, %v420
    %v422 = vpop.f32.mrb[0].mxu0
    %423 = vdwg.mxu0
    %v424 = vld [vmem:[%s7] sm:$0x1]
    %v426 = vlaneseq
    %v427 = vshrl.u32 %v426, 7
    %v428 = vsub.s32 0, %v427
    %v429 = vrot.slane %v424, %v428
    %v431 = vadd.f32 %v421, %v429
    %v432 = vmul.f32 %v431, %v180
    %433 = vst [vmem:[#allocation11] sm:$0xff] %v432
    // Predicated region
    $region54: #{tpu_custom_call.1} parent=1 // pred_check
      _
    $region55: #{tpu_custom_call.1} parent=1 // pred_check_branch
      %435 = sbr.rel (0) target = $region57
    $region56: #{tpu_custom_call.1} parent=1 // pred_region
      %s437 = ssub.s32 128, 128
      %438 = vsyncadd [#allocation4], %s437
      %s440 = sshll.u32 [#allocation11], 4
      %s441 = int_to_ptr.vmem [resolvable:$true] %s440
      %443 = dma.vmem_to_hbm [thread:$0]  %s441, 128, %s8, [#allocation4]
    $region57: #{tpu_custom_call.1} parent=1 // pred_fallthru
      _
    // Predicated region
    $region58: #{tpu_custom_call.1} parent=1 // pred_check
      _
    $region59: #{tpu_custom_call.1} parent=1 // pred_check_branch
      %445 = sbr.rel (0) target = $region61
    $region60: #{tpu_custom_call.1} parent=1 // pred_region
      %446 = dma.done [#allocation4], 128
    $region61: #{tpu_custom_call.1} parent=1 // pred_fallthru
      _
    %447 = vsyncpa [#allocation3], 1
    %448 = vsyncpa [#allocation6], 1
    %449 = vsyncpa [#allocation9], 1
    %450 = vsyncpa [#allocation4], 1

</llo_original>
